<compile_context>
chip_gen: v7x
topology: tpu7x:2x2x1
jax: 0.10.0
libtpu: 0.0.40
codegen_flags: <defaults>
</compile_context>

<pallas_src>
import functools

import jax
import jax.numpy as jnp
from jax.experimental import pallas as pl
from jax.experimental.pallas import tpu as pltpu


def _layernorm_kernel(x_ref, gamma_ref, beta_ref, o_ref, *, eps, n_valid, n_pad):
    # x_ref:     (TB, Np) block of flattened samples (Np = padded feature dim)
    # gamma_ref: (1, Np)  per-channel scale, pre-broadcast over H*W (0 in pad)
    # beta_ref:  (1, Np)  per-channel shift, pre-broadcast over H*W (0 in pad)
    x = x_ref[...].astype(jnp.float32)                       # (TB, Np)

    inv_n = 1.0 / float(n_valid)
    # Padded columns are zero, so the sum over Np equals the sum over N.
    mean = jnp.sum(x, axis=1, keepdims=True) * inv_n         # (TB, 1)

    xm = x - mean                                            # reused below
    sq = jnp.sum(xm * xm, axis=1, keepdims=True)             # (TB, 1)
    # Each padded (zero) column contributed mean^2 to sq; remove it, then use
    # the unbiased (n-1) divisor to match torch.std's default.
    pad_cols = float(n_pad - n_valid)
    var = (sq - pad_cols * mean * mean) / float(n_valid - 1)
    std = jnp.sqrt(var)

    # Module adds eps to std (outside the sqrt). Exact reciprocal keeps the
    # 1e-5 tolerance; the divide collapses to one per-row scalar op.
    rstd = pl.reciprocal(std + eps, approx=False)            # (TB, 1)

    gamma = gamma_ref[...].astype(jnp.float32)               # (1, Np)
    beta = beta_ref[...].astype(jnp.float32)                 # (1, Np)

    y = (xm * rstd) * gamma + beta
    o_ref[...] = y.astype(o_ref.dtype)


def _pick_batch_tile(B, Np, bytes_per_elem=4, target_bytes=2 << 20):
    """Pick TB: sublane-aligned (mult of 8) divisor of B whose block is ~2 MiB,
    preferring >= 2 grid steps (keeps both v7x TensorCores busy). Falls back to
    the full batch dim (always a legal block) for small/odd B."""
    max_tb = max(1, target_bytes // (Np * bytes_per_elem))
    cands = [d for d in range(8, B + 1, 8) if B % d == 0 and d <= max_tb]
    pref = [d for d in cands if B // d >= 2]
    if pref:
        return max(pref)
    if cands:
        return max(cands)
    return B


def layer_norm(x, gamma, beta, eps=1e-8):
    """Per-sample LayerNorm over (C,H,W) with per-channel affine, NCHW input."""
    B, C, H, W = x.shape
    N = C * H * W
    Np = ((N + 127) // 128) * 128      # lane-dense (multiple of 128) last dim

    xr = x.reshape(B, N)
    # Pre-broadcast per-channel params to the flattened feature layout once.
    gflat = jnp.repeat(gamma.astype(x.dtype), H * W).reshape(1, N)
    bflat = jnp.repeat(beta.astype(x.dtype), H * W).reshape(1, N)

    if Np != N:
        pad = Np - N
        xr = jnp.pad(xr, ((0, 0), (0, pad)))
        gflat = jnp.pad(gflat, ((0, 0), (0, pad)))
        bflat = jnp.pad(bflat, ((0, 0), (0, pad)))

    TB = _pick_batch_tile(B, Np)
    grid = (B // TB,)

    out = pl.pallas_call(
        functools.partial(_layernorm_kernel, eps=float(eps), n_valid=N, n_pad=Np),
        out_shape=jax.ShapeDtypeStruct((B, Np), x.dtype),
        grid=grid,
        in_specs=[
            pl.BlockSpec((TB, Np), lambda i: (i, 0)),
            pl.BlockSpec((1, Np), lambda i: (0, 0)),
            pl.BlockSpec((1, Np), lambda i: (0, 0)),
        ],
        out_specs=pl.BlockSpec((TB, Np), lambda i: (i, 0)),
        compiler_params=pltpu.CompilerParams(
            dimension_semantics=("parallel",),
            vmem_limit_bytes=32 * 1024 * 1024,  # safe on v5e/v6e/v7x
        ),
    )(xr, gflat, bflat)

    if Np != N:
        out = out[:, :N]
    return out.reshape(B, C, H, W)


def layer_norm_ref(x, gamma, beta, eps=1e-8):
    """Plain-JAX reference mirroring the PyTorch forward."""
    B = x.shape[0]
    xf = x.reshape(B, -1).astype(jnp.float32)
    mean = xf.mean(axis=1).reshape(B, 1, 1, 1)
    var = jnp.sum((xf - xf.mean(axis=1, keepdims=True)) ** 2, axis=1) / (
        xf.shape[1] - 1)  # unbiased, matches torch.std default
    std = jnp.sqrt(var).reshape(B, 1, 1, 1)
    y = (x - mean) / (std + eps)
    return y * gamma.reshape(1, -1, 1, 1) + beta.reshape(1, -1, 1, 1)


if __name__ == "__main__":
    key = jax.random.PRNGKey(0)
    kx, kg, kx2 = jax.random.split(key, 3)

    # Small shapes consistent with the module: batch=2, channels=4, spatial=16.
    B, C, H, W = 2, 4, 16, 16
    x = jax.random.normal(kx, (B, C, H, W), dtype=jnp.float32)

    # Deterministic parameter init matching the module:
    # gamma ~ Uniform[0,1), beta = zeros.
    gamma = jax.random.uniform(kg, (C,), dtype=jnp.float32)
    beta = jnp.zeros((C,), dtype=jnp.float32)

    out = layer_norm(x, gamma, beta, eps=1e-8)
    out = jax.block_until_ready(out)
    ref = layer_norm_ref(x, gamma, beta, eps=1e-8)
    assert out.shape == (B, C, H, W)
    assert jnp.allclose(out, ref, atol=1e-5, rtol=1e-5)

    # Also exercise the non-multiple-of-128 feature path (lane padding + var
    # correction): 4 * 14 * 14 = 784 -> padded to 896 lanes.
    x2 = jax.random.normal(kx2, (B, C, 14, 14), dtype=jnp.float32)
    out2 = jax.block_until_ready(layer_norm(x2, gamma, beta, eps=1e-8))
    ref2 = layer_norm_ref(x2, gamma, beta, eps=1e-8)
    assert jnp.allclose(out2, ref2, atol=1e-5, rtol=1e-5)

    print("KERNEL_OK")
</pallas_src>

<mosaic_0001>
module attributes {stable_mosaic.version = 11 : i64} {
  func.func @_layernorm_kernel(%arg0: i32, %arg1: memref<2x1024xf32, #tpu.memory_space<vmem>>, %arg2: memref<1x1024xf32, #tpu.memory_space<vmem>>, %arg3: memref<1x1024xf32, #tpu.memory_space<vmem>>, %arg4: memref<2x1024xf32, #tpu.memory_space<vmem>>) attributes {dimension_semantics = [#tpu.dimension_semantics<parallel>], iteration_bounds = array<i64: 1>, scalar_prefetch = 0 : i64, scratch_operands = 0 : i64, tpu.core_type = #tpu.core_type<tc>, window_params = [{transform_indices = @transform_0, window_bounds = array<i64: 2, 1024>}, {pipeline_mode = #tpu.pipeline_mode<synchronous>, transform_indices = @transform_1, window_bounds = array<i64: 1, 1024>}, {pipeline_mode = #tpu.pipeline_mode<synchronous>, transform_indices = @transform_2, window_bounds = array<i64: 1, 1024>}, {transform_indices = @transform_3, window_bounds = array<i64: 2, 1024>}]} {
    %c0 = arith.constant 0 : index
    %c0_0 = arith.constant 0 : index
    %0 = vector.load %arg1[%c0, %c0_0] : memref<2x1024xf32, #tpu.memory_space<vmem>>, vector<2x1024xf32>
    %cst = arith.constant dense<0.000000e+00> : vector<2xf32>
    %1 = vector.multi_reduction <add>, %0, %cst [1] : vector<2x1024xf32> to vector<2xf32>
    %2 = vector.shape_cast %1 : vector<2xf32> to vector<2x1xf32>
    %cst_1 = arith.constant 9.765625E-4 : f32
    %3 = vector.broadcast %cst_1 : f32 to vector<2x1xf32>
    %4 = arith.mulf %2, %3 : vector<2x1xf32>
    %5 = vector.broadcast %4 : vector<2x1xf32> to vector<2x1024xf32>
    %6 = arith.subf %0, %5 : vector<2x1024xf32>
    %7 = arith.mulf %6, %6 : vector<2x1024xf32>
    %cst_2 = arith.constant dense<0.000000e+00> : vector<2xf32>
    %8 = vector.multi_reduction <add>, %7, %cst_2 [1] : vector<2x1024xf32> to vector<2xf32>
    %9 = vector.shape_cast %8 : vector<2xf32> to vector<2x1xf32>
    %cst_3 = arith.constant 0.000000e+00 : f32
    %10 = vector.broadcast %cst_3 : f32 to vector<2x1xf32>
    %11 = arith.mulf %10, %4 : vector<2x1xf32>
    %12 = arith.mulf %11, %4 : vector<2x1xf32>
    %13 = arith.subf %9, %12 : vector<2x1xf32>
    %cst_4 = arith.constant 1.023000e+03 : f32
    %14 = vector.broadcast %cst_4 : f32 to vector<2x1xf32>
    %15 = arith.divf %13, %14 : vector<2x1xf32>
    %16 = math.sqrt %15 : vector<2x1xf32>
    %cst_5 = arith.constant 9.99999993E-9 : f32
    %17 = vector.broadcast %cst_5 : f32 to vector<2x1xf32>
    %18 = arith.addf %16, %17 : vector<2x1xf32>
    %19 = tpu.reciprocal %18 : vector<2x1xf32> -> vector<2x1xf32>
    %c0_6 = arith.constant 0 : index
    %c0_7 = arith.constant 0 : index
    %20 = vector.load %arg2[%c0_6, %c0_7] : memref<1x1024xf32, #tpu.memory_space<vmem>>, vector<1x1024xf32>
    %c0_8 = arith.constant 0 : index
    %c0_9 = arith.constant 0 : index
    %21 = vector.load %arg3[%c0_8, %c0_9] : memref<1x1024xf32, #tpu.memory_space<vmem>>, vector<1x1024xf32>
    %22 = vector.broadcast %19 : vector<2x1xf32> to vector<2x1024xf32>
    %23 = arith.mulf %6, %22 : vector<2x1024xf32>
    %24 = vector.broadcast %20 : vector<1x1024xf32> to vector<2x1024xf32>
    %25 = arith.mulf %23, %24 : vector<2x1024xf32>
    %26 = vector.broadcast %21 : vector<1x1024xf32> to vector<2x1024xf32>
    %27 = arith.addf %25, %26 : vector<2x1024xf32>
    %c0_10 = arith.constant 0 : index
    %c0_11 = arith.constant 0 : index
    %28 = vector.load %arg4[%c0_10, %c0_11] : memref<2x1024xf32, #tpu.memory_space<vmem>>, vector<2x1024xf32>
    tpu.vector_store %arg4[%c0_10, %c0_11], %27 {strides = array<i32>} : memref<2x1024xf32, #tpu.memory_space<vmem>>, vector<2x1024xf32>,
    return
  }
  func.func @transform_0(%arg0: i32) -> (i32, i32) {
    %c0_i32 = arith.constant 0 : i32
    %c0_i32_0 = arith.constant 0 : i32
    return %arg0, %c0_i32 : i32, i32
  }
  func.func @transform_1(%arg0: i32) -> (i32, i32) {
    %c0_i32 = arith.constant 0 : i32
    %c0_i32_0 = arith.constant 0 : i32
    %c0_i32_1 = arith.constant 0 : i32
    return %c0_i32, %c0_i32_0 : i32, i32
  }
  func.func @transform_2(%arg0: i32) -> (i32, i32) {
    %c0_i32 = arith.constant 0 : i32
    %c0_i32_0 = arith.constant 0 : i32
    %c0_i32_1 = arith.constant 0 : i32
    return %c0_i32, %c0_i32_0 : i32, i32
  }
  func.func @transform_3(%arg0: i32) -> (i32, i32) {
    %c0_i32 = arith.constant 0 : i32
    %c0_i32_0 = arith.constant 0 : i32
    return %arg0, %c0_i32 : i32, i32
  }
}

</mosaic_0001>

<llo_original>
// kernel: tpu_custom_call.1
$region0: #{tpu_custom_call.1}
  #allocation0 [shape = 'u32[]', space=smem, size = 0x4, offset = 0x4, fixed_abs, tag = 'smem constant byte address 0x4 - core index']
  #allocation1 [shape = 'u32[144,128]{1,0:T(1,128)}', space=vmem, size = 0x12000, scoped, tag = 'internal scratch']
  %s0 = inlined_call_operand.hbm [shape: f32[2,1024], index: 0, kind: input, shape index: {}]
  %s1 = inlined_call_operand.hbm [shape: f32[1,1024], index: 1, kind: input, shape index: {}]
  %s2 = inlined_call_operand.hbm [shape: f32[1,1024], index: 2, kind: input, shape index: {}]
  %s3 = inlined_call_operand.hbm [shape: f32[2,1024], index: 3, kind: output, shape index: {}]
  %s4 = sld [smem:[#allocation0]]
  $region34: #{tpu_custom_call.1} parent=0
    _
  %s6 = ssub.s32 1, %s4
  %s7 = scalar_select 0, %s6, %s4
  $region1: #{tpu_custom_call.1} parent=0
    #allocation2 [shape = 'u8[8192]{0}', space=vmem, size = 0x2000, scoped, tag = 'input window, operand 0, single buffered']
    #allocation3 [shape = 's32[1]{0}', space=sflag, size = 0x4, scoped, tag = 'scoped memory for tpu_custom_call.1']
    #allocation4 [shape = 's32[1]{0}', space=sflag, size = 0x4, scoped, tag = 'scoped memory for tpu_custom_call.1']
    #allocation5 [shape = 'u8[4096]{0}', space=vmem, size = 0x1000, scoped, tag = 'input window, operand 1, single buffered']
    #allocation6 [shape = 's32[1]{0}', space=sflag, size = 0x4, scoped, tag = 'scoped memory for tpu_custom_call.1']
    #allocation7 [shape = 'u8[4096]{0}', space=vmem, size = 0x1000, scoped, tag = 'input window, operand 2, single buffered']
    #allocation8 [shape = 'u8[8192]{0}', space=vmem, size = 0x2000, scoped, tag = 'output window, operand 0, single buffered']
    %8 = vsyncpa [#allocation3], 0
    %9 = vsyncpa [#allocation6], 0
    %10 = vsyncpa [#allocation4], 0
    // Predicated region
    $region2: #{tpu_custom_call.1} parent=1 // pred_check
      _
    $region3: #{tpu_custom_call.1} parent=1 // pred_check_branch
      %12 = sbr.rel (0) target = $region5
    $region4: #{tpu_custom_call.1} parent=1 // pred_region
      %s14 = ssub.s32 256, 256
      %15 = vsyncadd [#allocation3], %s14
      %s17 = sshll.u32 [#allocation2], 4
      %s18 = int_to_ptr.vmem [resolvable:$true] %s17
      %20 = dma.hbm_to_vmem [thread:$0]  %s0, 256, %s18, [#allocation3]
    $region5: #{tpu_custom_call.1} parent=1 // pred_fallthru
      _
    // Predicated region
    $region6: #{tpu_custom_call.1} parent=1 // pred_check
      _
    $region7: #{tpu_custom_call.1} parent=1 // pred_check_branch
      %22 = sbr.rel (0) target = $region9
    $region8: #{tpu_custom_call.1} parent=1 // pred_region
      %s24 = ssub.s32 128, 128
      %25 = vsyncadd [#allocation6], %s24
      %s27 = sshll.u32 [#allocation5], 4
      %s28 = int_to_ptr.vmem [resolvable:$true] %s27
      %30 = dma.hbm_to_vmem [thread:$0]  %s1, 128, %s28, [#allocation6]
    $region9: #{tpu_custom_call.1} parent=1 // pred_fallthru
      _
    // Predicated region
    $region10: #{tpu_custom_call.1} parent=1 // pred_check
      _
    $region11: #{tpu_custom_call.1} parent=1 // pred_check_branch
      %32 = sbr.rel (0) target = $region13
    $region12: #{tpu_custom_call.1} parent=1 // pred_region
      %s34 = ssub.s32 128, 128
      %35 = vsyncadd [#allocation6], %s34
      %s37 = sshll.u32 [#allocation7], 4
      %s38 = int_to_ptr.vmem [resolvable:$true] %s37
      %40 = dma.hbm_to_vmem [thread:$0]  %s2, 128, %s38, [#allocation6]
    $region13: #{tpu_custom_call.1} parent=1 // pred_fallthru
      _
    // Predicated region
    $region14: #{tpu_custom_call.1} parent=1 // pred_check
      _
    $region15: #{tpu_custom_call.1} parent=1 // pred_check_branch
      %42 = sbr.rel (0) target = $region17
    $region16: #{tpu_custom_call.1} parent=1 // pred_region
      %43 = dma.done [#allocation3], 256
    $region17: #{tpu_custom_call.1} parent=1 // pred_fallthru
      _
    // Predicated region
    $region18: #{tpu_custom_call.1} parent=1 // pred_check
      _
    $region19: #{tpu_custom_call.1} parent=1 // pred_check_branch
      %45 = sbr.rel (0) target = $region21
    $region20: #{tpu_custom_call.1} parent=1 // pred_region
      %46 = dma.done [#allocation6], 128
    $region21: #{tpu_custom_call.1} parent=1 // pred_fallthru
      _
    // Predicated region
    $region22: #{tpu_custom_call.1} parent=1 // pred_check
      _
    $region23: #{tpu_custom_call.1} parent=1 // pred_check_branch
      %48 = sbr.rel (0) target = $region25
    $region24: #{tpu_custom_call.1} parent=1 // pred_region
      %49 = dma.done [#allocation6], 128
    $region25: #{tpu_custom_call.1} parent=1 // pred_fallthru
      _
    %v50 = vld [vmem:[#allocation2] sm:$0xff]
    %v51 = vld [vmem:[#allocation2 + $0x8] sm:$0xff]
    %v54 = vcombine.high %v50, %v50
    %v56 = vunpack.c.l.s4 1983009808
    %v57 = vunpack.c.0.s8 %v56
    %v58 = vlaneseq
    %v59 = vshrl.u32 %v58, 7
    %v60 = vsub.s32 %v57, %v59
    %v61 = vrot.slane %v50, %v60
    %v63 = vunpack.c.l.s4 1983009808
    %v64 = vunpack.c.0.s8 %v63
    %v65 = vlaneseq
    %v66 = vshrl.u32 %v65, 7
    %v67 = vsub.s32 %v64, %v66
    %v68 = vrot.slane %v54, %v67
    %v69 = vcombine.high %v61, %v61
    %v70 = vcombine.high %v68, %v68
    %v71 = vcombine.high %v51, %v51
    %v73 = vunpack.c.l.s4 1983009808
    %v74 = vunpack.c.0.s8 %v73
    %v75 = vlaneseq
    %v76 = vshrl.u32 %v75, 7
    %v77 = vsub.s32 %v74, %v76
    %v78 = vrot.slane %v51, %v77
    %v80 = vunpack.c.l.s4 1983009808
    %v81 = vunpack.c.0.s8 %v80
    %v82 = vlaneseq
    %v83 = vshrl.u32 %v82, 7
    %v84 = vsub.s32 %v81, %v83
    %v85 = vrot.slane %v71, %v84
    %v86 = vcombine.high %v78, %v78
    %v87 = vcombine.high %v85, %v85
    %vm96 = vcmask 1041408
    %v97 = vsel %vm96, %v61, 0.0
    %v98 = vsel %vm96, %v69, 0.0
    %v99 = vadd.f32 %v97, %v98
    %v100 = vsel %vm96, %v68, 0.0
    %v101 = vadd.f32 %v99, %v100
    %v102 = vsel %vm96, %v70, 0.0
    %v103 = vadd.f32 %v101, %v102
    %v104 = vsel %vm96, %v78, 0.0
    %v105 = vadd.f32 %v103, %v104
    %v106 = vsel %vm96, %v86, 0.0
    %v107 = vadd.f32 %v105, %v106
    %v108 = vsel %vm96, %v85, 0.0
    %v109 = vadd.f32 %v107, %v108
    %v110 = vsel %vm96, %v87, 0.0
    %v111 = vadd.f32 %v109, %v110
    %112 = vadd.xlane.f32.xlu0 %v111
    %v113 = vpop.xlane.xlu0 %112
    %v114 = vmul.f32 %v113, 0.0009765625
    %v117 = vunpack.c.l.s4 269488144
    %v118 = vunpack.c.0.s8 %v117
    %v119 = vlaneseq
    %v120 = vshrl.u32 %v119, 7
    %v121 = vsub.s32 %v118, %v120
    %v122 = vrot.slane %v114, %v121
    %v124 = vsub.f32 %v50, %v122
    %v125 = vsub.f32 %v51, %v122
    %v126 = vmul.f32 %v124, %v124
    %v127 = vmul.f32 %v125, %v125
    %v130 = vcombine.high %v126, %v126
    %v132 = vunpack.c.l.s4 1983009808
    %v133 = vunpack.c.0.s8 %v132
    %v134 = vlaneseq
    %v135 = vshrl.u32 %v134, 7
    %v136 = vsub.s32 %v133, %v135
    %v137 = vrot.slane %v126, %v136
    %v139 = vunpack.c.l.s4 1983009808
    %v140 = vunpack.c.0.s8 %v139
    %v141 = vlaneseq
    %v142 = vshrl.u32 %v141, 7
    %v143 = vsub.s32 %v140, %v142
    %v144 = vrot.slane %v130, %v143
    %v145 = vcombine.high %v137, %v137
    %v146 = vcombine.high %v144, %v144
    %v147 = vcombine.high %v127, %v127
    %v149 = vunpack.c.l.s4 1983009808
    %v150 = vunpack.c.0.s8 %v149
    %v151 = vlaneseq
    %v152 = vshrl.u32 %v151, 7
    %v153 = vsub.s32 %v150, %v152
    %v154 = vrot.slane %v127, %v153
    %v156 = vunpack.c.l.s4 1983009808
    %v157 = vunpack.c.0.s8 %v156
    %v158 = vlaneseq
    %v159 = vshrl.u32 %v158, 7
    %v160 = vsub.s32 %v157, %v159
    %v161 = vrot.slane %v147, %v160
    %v162 = vcombine.high %v154, %v154
    %v163 = vcombine.high %v161, %v161
    %v172 = vsel %vm96, %v137, 0.0
    %v173 = vsel %vm96, %v145, 0.0
    %v174 = vadd.f32 %v172, %v173
    %v175 = vsel %vm96, %v144, 0.0
    %v176 = vadd.f32 %v174, %v175
    %v177 = vsel %vm96, %v146, 0.0
    %v178 = vadd.f32 %v176, %v177
    %v179 = vsel %vm96, %v154, 0.0
    %v180 = vadd.f32 %v178, %v179
    %v181 = vsel %vm96, %v162, 0.0
    %v182 = vadd.f32 %v180, %v181
    %v183 = vsel %vm96, %v161, 0.0
    %v184 = vadd.f32 %v182, %v183
    %v185 = vsel %vm96, %v163, 0.0
    %v186 = vadd.f32 %v184, %v185
    %187 = vadd.xlane.f32.xlu0 %v186
    %v188 = vpop.xlane.xlu0 %187
    %v189 = vmul.f32 %v114, 0.0
    %v190 = vmul.f32 %v189, %v114
    %v191 = vsub.f32 %v188, %v190
    %v192 = vrcp.pop 1023.0
    %v193 = vmul.f32 %v191, %v192
    %v194 = vrsqrt.pop %v193
    %v195 = vmul.f32 %v193, %v194
    %vm196 = vcmp.eq.f32.partialorder %v193, inf
    %v197 = vsel %vm196, %v193, %v195
    %vm198 = vcmp.eq.f32.partialorder %v193, 0.0
    %v199 = vand.u32 %v193, 2147483648
    %v200 = vsel %vm198, %v199, %v197
    %v201 = vadd.f32 %v200, 1e-08
    %v202 = vrcp.pop %v201
    %v203 = vld [vmem:[#allocation5] sm:$0xff]
    %v204 = vld [vmem:[#allocation7] sm:$0xff]
    %v207 = vunpack.c.l.s4 269488144
    %v208 = vunpack.c.0.s8 %v207
    %v209 = vlaneseq
    %v210 = vshrl.u32 %v209, 7
    %v211 = vsub.s32 %v208, %v210
    %v212 = vrot.slane %v202, %v211
    %v214 = vmul.f32 %v124, %v212
    %v215 = vmul.f32 %v125, %v212
    %v217 = vlaneseq
    %v218 = vshrl.u32 %v217, 7
    %v219 = vsub.s32 0, %v218
    %v220 = vrot.slane %v203, %v219
    %v221 = vlaneseq
    %v222 = vshrl.u32 %v221, 7
    %v223 = vsub.s32 1, %v222
    %v224 = vrot.slane %v203, %v223
    %v225 = vlaneseq
    %v226 = vshrl.u32 %v225, 7
    %v227 = vsub.s32 2, %v226
    %v228 = vrot.slane %v203, %v227
    %v229 = vlaneseq
    %v230 = vshrl.u32 %v229, 7
    %v231 = vsub.s32 3, %v230
    %v232 = vrot.slane %v203, %v231
    %v233 = vlaneseq
    %v234 = vshrl.u32 %v233, 7
    %v235 = vsub.s32 4, %v234
    %v236 = vrot.slane %v203, %v235
    %v237 = vlaneseq
    %v238 = vshrl.u32 %v237, 7
    %v239 = vsub.s32 5, %v238
    %v240 = vrot.slane %v203, %v239
    %v241 = vlaneseq
    %v242 = vshrl.u32 %v241, 7
    %v243 = vsub.s32 6, %v242
    %v244 = vrot.slane %v203, %v243
    %v245 = vlaneseq
    %v246 = vshrl.u32 %v245, 7
    %v247 = vsub.s32 7, %v246
    %v248 = vrot.slane %v203, %v247
    %v249 = vcombine.low %v220, %v224
    %v250 = vcombine.low %v228, %v232
    %v252 = vunpack.c.l.s4 1983009808
    %v253 = vunpack.c.0.s8 %v252
    %v254 = vlaneseq
    %v255 = vshrl.u32 %v254, 7
    %v256 = vsub.s32 %v253, %v255
    %v257 = vrot.slane %v249, %v256
    %v259 = vunpack.c.l.s4 1983009808
    %v260 = vunpack.c.0.s8 %v259
    %v261 = vlaneseq
    %v262 = vshrl.u32 %v261, 7
    %v263 = vsub.s32 %v260, %v262
    %v264 = vrot.slane %v250, %v263
    %v265 = vcombine.low %v257, %v264
    %v266 = vcombine.low %v236, %v240
    %v267 = vcombine.low %v244, %v248
    %v269 = vunpack.c.l.s4 1983009808
    %v270 = vunpack.c.0.s8 %v269
    %v271 = vlaneseq
    %v272 = vshrl.u32 %v271, 7
    %v273 = vsub.s32 %v270, %v272
    %v274 = vrot.slane %v266, %v273
    %v276 = vunpack.c.l.s4 1983009808
    %v277 = vunpack.c.0.s8 %v276
    %v278 = vlaneseq
    %v279 = vshrl.u32 %v278, 7
    %v280 = vsub.s32 %v277, %v279
    %v281 = vrot.slane %v267, %v280
    %v282 = vcombine.low %v274, %v281
    %v285 = vmul.f32 %v214, %v265
    %v286 = vmul.f32 %v215, %v282
    %v288 = vlaneseq
    %v289 = vshrl.u32 %v288, 7
    %v290 = vsub.s32 0, %v289
    %v291 = vrot.slane %v204, %v290
    %v292 = vlaneseq
    %v293 = vshrl.u32 %v292, 7
    %v294 = vsub.s32 1, %v293
    %v295 = vrot.slane %v204, %v294
    %v296 = vlaneseq
    %v297 = vshrl.u32 %v296, 7
    %v298 = vsub.s32 2, %v297
    %v299 = vrot.slane %v204, %v298
    %v300 = vlaneseq
    %v301 = vshrl.u32 %v300, 7
    %v302 = vsub.s32 3, %v301
    %v303 = vrot.slane %v204, %v302
    %v304 = vlaneseq
    %v305 = vshrl.u32 %v304, 7
    %v306 = vsub.s32 4, %v305
    %v307 = vrot.slane %v204, %v306
    %v308 = vlaneseq
    %v309 = vshrl.u32 %v308, 7
    %v310 = vsub.s32 5, %v309
    %v311 = vrot.slane %v204, %v310
    %v312 = vlaneseq
    %v313 = vshrl.u32 %v312, 7
    %v314 = vsub.s32 6, %v313
    %v315 = vrot.slane %v204, %v314
    %v316 = vlaneseq
    %v317 = vshrl.u32 %v316, 7
    %v318 = vsub.s32 7, %v317
    %v319 = vrot.slane %v204, %v318
    %v320 = vcombine.low %v291, %v295
    %v321 = vcombine.low %v299, %v303
    %v323 = vunpack.c.l.s4 1983009808
    %v324 = vunpack.c.0.s8 %v323
    %v325 = vlaneseq
    %v326 = vshrl.u32 %v325, 7
    %v327 = vsub.s32 %v324, %v326
    %v328 = vrot.slane %v320, %v327
    %v330 = vunpack.c.l.s4 1983009808
    %v331 = vunpack.c.0.s8 %v330
    %v332 = vlaneseq
    %v333 = vshrl.u32 %v332, 7
    %v334 = vsub.s32 %v331, %v333
    %v335 = vrot.slane %v321, %v334
    %v336 = vcombine.low %v328, %v335
    %v337 = vcombine.low %v307, %v311
    %v338 = vcombine.low %v315, %v319
    %v340 = vunpack.c.l.s4 1983009808
    %v341 = vunpack.c.0.s8 %v340
    %v342 = vlaneseq
    %v343 = vshrl.u32 %v342, 7
    %v344 = vsub.s32 %v341, %v343
    %v345 = vrot.slane %v337, %v344
    %v347 = vunpack.c.l.s4 1983009808
    %v348 = vunpack.c.0.s8 %v347
    %v349 = vlaneseq
    %v350 = vshrl.u32 %v349, 7
    %v351 = vsub.s32 %v348, %v350
    %v352 = vrot.slane %v338, %v351
    %v353 = vcombine.low %v345, %v352
    %v356 = vadd.f32 %v285, %v336
    %v357 = vadd.f32 %v286, %v353
    %358 = vst [vmem:[#allocation8] sm:$0xff] %v356
    %359 = vst [vmem:[#allocation8 + $0x8] sm:$0xff] %v357
    // Predicated region
    $region26: #{tpu_custom_call.1} parent=1 // pred_check
      _
    $region27: #{tpu_custom_call.1} parent=1 // pred_check_branch
      %361 = sbr.rel (0) target = $region29
    $region28: #{tpu_custom_call.1} parent=1 // pred_region
      %s363 = ssub.s32 256, 256
      %364 = vsyncadd [#allocation4], %s363
      %s366 = sshll.u32 [#allocation8], 4
      %s367 = int_to_ptr.vmem [resolvable:$true] %s366
      %369 = dma.vmem_to_hbm [thread:$0]  %s367, 256, %s3, [#allocation4]
    $region29: #{tpu_custom_call.1} parent=1 // pred_fallthru
      _
    // Predicated region
    $region30: #{tpu_custom_call.1} parent=1 // pred_check
      _
    $region31: #{tpu_custom_call.1} parent=1 // pred_check_branch
      %371 = sbr.rel (0) target = $region33
    $region32: #{tpu_custom_call.1} parent=1 // pred_region
      %372 = dma.done [#allocation4], 256
    $region33: #{tpu_custom_call.1} parent=1 // pred_fallthru
      _
    %373 = vsyncpa [#allocation3], 1
    %374 = vsyncpa [#allocation6], 1
    %375 = vsyncpa [#allocation4], 1

</llo_original>
